<compile_context>
chip_gen: v7x
topology: tpu7x:2x2x1
jax: 0.10.0
libtpu: 0.0.40
codegen_flags: <defaults>
</compile_context>

<pallas_src>
import math
import functools

import jax
import jax.numpy as jnp
from jax.experimental import pallas as pl
from jax.experimental.pallas import tpu as pltpu


# ----------------------------------------------------------------------------
# Parameter construction (plain JAX/numpy) — mirrors PyTorch __init__
# ----------------------------------------------------------------------------
def build_pe_table(max_seq_len: int, d_model: int) -> jnp.ndarray:
    """Exact reproduction of the (quirky, non-standard) PyTorch fill loop."""
    assert d_model % 2 == 0, "d_model must be even (as in the PyTorch module)"
    pe = [[0.0] * d_model for _ in range(max_seq_len)]
    for pos in range(max_seq_len):
        for i in range(0, d_model, 2):
            pe[pos][i] = math.sin(pos / 10000 ** (2 * i / d_model))
            pe[pos][i + 1] = math.cos(pos / 10000 ** (2 * (i + 1) / d_model))
    return jnp.asarray(pe, dtype=jnp.float32)  # (max_seq_len, d_model)


# ----------------------------------------------------------------------------
# Kernels
# ----------------------------------------------------------------------------
def _pos_enc_flat_kernel(x_ref, pe_ref, o_ref, *, batch, d_model, seq_tile,
                         pe_resident, sublane):
    # x_ref/o_ref: (seq_tile, B*D)
    # pe_ref     : (seq_tile, D) f32, or (grid*seq_tile, D) f32 when resident.
    if pe_resident:
        start = pl.multiple_of(pl.program_id(0) * seq_tile, sublane)
        pe = pe_ref[pl.ds(start, seq_tile), :]
    else:
        pe = pe_ref[...]
    pe = pe.astype(jnp.float32)

    if batch == 1:
        o_ref[...] = (x_ref[...].astype(jnp.float32) + pe).astype(o_ref.dtype)
    elif d_model % 128 == 0:
        # Static per-batch loop over 128-aligned ref slices (zero-cost views);
        # keeps live data at (seq_tile, D) — no replicated temp.
        for b in range(batch):
            sl = slice(b * d_model, (b + 1) * d_model)
            o_ref[:, sl] = (x_ref[:, sl].astype(jnp.float32) + pe).astype(o_ref.dtype)
    else:
        # (B*D) % 128 == 0 but D % 128 != 0: chunked slices would not be
        # lane-aligned, so replicate pe across the flattened batch groups.
        pe_full = jnp.concatenate([pe] * batch, axis=-1)
        o_ref[...] = (x_ref[...].astype(jnp.float32) + pe_full).astype(o_ref.dtype)


def _pos_enc_3d_kernel(x_ref, pe_ref, o_ref):
    # x_ref/o_ref: (seq_tile, B, D)   pe_ref: (seq_tile, D) f32
    o_ref[...] = (x_ref[...].astype(jnp.float32)
                  + pe_ref[...].astype(jnp.float32)[:, None, :]).astype(o_ref.dtype)


# ----------------------------------------------------------------------------
# Wrapper
# ----------------------------------------------------------------------------
def _sublane_multiple(dtype) -> int:
    """Packed sublane multiple: 8 for 4-byte, 16 for 2-byte, 32 for 1-byte."""
    return max(8, 32 // max(1, jnp.dtype(dtype).itemsize))


def _choose_seq_tile(seq_len, row_bytes, target_block_bytes, sublane):
    """Rows per block: ~target_block_bytes, multiple of the packed sublane,
    capped so the grid has >= 2 steps when S allows it (megacore)."""
    if seq_len <= sublane:
        return seq_len                          # full extent — always legal
    t = max(1, target_block_bytes // max(row_bytes, 1))
    tile = max(sublane, (min(t, seq_len) // sublane) * sublane)
    if seq_len >= 2 * sublane:
        half = -(-seq_len // 2)                 # ceil(S/2)
        half = -(-half // sublane) * sublane    # round up to sublane multiple
        tile = min(tile, half)
    return min(tile, seq_len)


_COMPILER_PARAMS = pltpu.CompilerParams(
    dimension_semantics=("parallel",),          # megacore sharding on v7x
    vmem_limit_bytes=32 * 1024 * 1024,          # safe on v5e/v6e (128 MiB) and v7x (64 MiB)
)

_PE_RESIDENT_MAX_BYTES = 2 * 1024 * 1024        # keep resident pe small


@functools.partial(jax.jit, static_argnames=("target_block_bytes",))
def position_encoder_forward(x, pe, w, *, target_block_bytes=4 << 20):
    """x: (S, B, D); pe, w: (max_seq_len, D). Returns x + pe[:S]*sigmoid(w[:S])."""
    S, B, D = x.shape
    itemsize = jnp.dtype(x.dtype).itemsize
    sublane = _sublane_multiple(x.dtype)

    # Hoisted out of the kernel, kept in f32 (precision parity with PyTorch).
    pe_use = (pe[:S].astype(jnp.float32)
              * jax.nn.sigmoid(w[:S].astype(jnp.float32)))          # (S, D) f32

    seq_tile = _choose_seq_tile(S, B * D * itemsize, target_block_bytes, sublane)
    num_steps = pl.cdiv(S, seq_tile)
    grid = (num_steps,)

    cost = pl.CostEstimate(
        flops=S * B * D,
        transcendentals=0,
        bytes_accessed=2 * S * B * D * itemsize + S * D * 4,
    )

    if (B * D) % 128 == 0 or B == 1:
        # Lane-dense path: view x as (S, B*D) — free reshape of contiguous dims.
        x2 = x.reshape(S, B * D)

        # Resident pe: fetched once (constant block index), sliced in-kernel.
        pe_resident = (num_steps > 1
                       and num_steps * seq_tile * D * 4 <= _PE_RESIDENT_MAX_BYTES)
        if pe_resident:
            pad_rows = num_steps * seq_tile
            if pad_rows > S:
                pe_use = jnp.pad(pe_use, ((0, pad_rows - S), (0, 0)))
            pe_spec = pl.BlockSpec((pad_rows, D), lambda i: (0, 0))
        else:
            pe_spec = pl.BlockSpec((seq_tile, D), lambda i: (i, 0))

        kernel = functools.partial(
            _pos_enc_flat_kernel, batch=B, d_model=D, seq_tile=seq_tile,
            pe_resident=pe_resident, sublane=sublane)

        out2 = pl.pallas_call(
            kernel,
            out_shape=jax.ShapeDtypeStruct((S, B * D), x.dtype),
            grid_spec=pltpu.PrefetchScalarGridSpec(
                num_scalar_prefetch=0,
                grid=grid,
                in_specs=[pl.BlockSpec((seq_tile, B * D), lambda i: (i, 0)),
                          pe_spec],
                out_specs=pl.BlockSpec((seq_tile, B * D), lambda i: (i, 0)),
            ),
            input_output_aliases={0: 0},        # elementwise-in-place on x
            cost_estimate=cost,
            compiler_params=_COMPILER_PARAMS,
        )(x2, pe_use)
        return out2.reshape(S, B, D)

    # Fallback ((B*D) not a multiple of 128): keep the 3-D layout.
    return pl.pallas_call(
        _pos_enc_3d_kernel,
        out_shape=jax.ShapeDtypeStruct((S, B, D), x.dtype),
        grid_spec=pltpu.PrefetchScalarGridSpec(
            num_scalar_prefetch=0,
            grid=grid,
            in_specs=[pl.BlockSpec((seq_tile, B, D), lambda i: (i, 0, 0)),
                      pl.BlockSpec((seq_tile, D), lambda i: (i, 0))],
            out_specs=pl.BlockSpec((seq_tile, B, D), lambda i: (i, 0, 0)),
        ),
        input_output_aliases={0: 0},
        cost_estimate=cost,
        compiler_params=_COMPILER_PARAMS,
    )(x, pe_use)


# ----------------------------------------------------------------------------
# Reference (pure JAX) for verification
# ----------------------------------------------------------------------------
def position_encoder_ref(x, pe, w):
    S = x.shape[0]
    pe_use = pe[:S].astype(jnp.float32) * jax.nn.sigmoid(w[:S].astype(jnp.float32))
    return (x.astype(jnp.float32) + pe_use[:, None, :]).astype(x.dtype)


def _run_case(key, seq_len, batch, d_model, max_seq_len, target_block_bytes,
              dtype=jnp.float32):
    k1, k2 = jax.random.split(key)
    pe = build_pe_table(max_seq_len, d_model)
    w = jax.random.normal(k1, (max_seq_len, d_model), jnp.float32)
    x = jax.random.normal(k2, (seq_len, batch, d_model), dtype)

    out = position_encoder_forward(x, pe, w, target_block_bytes=target_block_bytes)
    out = jax.block_until_ready(out)

    ref = position_encoder_ref(x, pe, w)
    assert out.shape == (seq_len, batch, d_model)
    tol = 1e-5 if dtype == jnp.float32 else 2e-2
    ok = jnp.allclose(out.astype(jnp.float32), ref.astype(jnp.float32),
                      atol=tol, rtol=tol)
    assert ok, f"mismatch vs reference (S={seq_len}, B={batch}, D={d_model}, {dtype})"


if __name__ == "__main__":
    root = jax.random.PRNGKey(0)
    ks = jax.random.split(root, 5)

    # Flat path, D % 128 == 0: per-batch chunked writes, resident pe, grid=(2,).
    _run_case(ks[0], seq_len=16, batch=2, d_model=128, max_seq_len=32,
              target_block_bytes=8 * 1024)
    # Ragged tail (S % seq_tile != 0), larger batch on the chunked flat path.
    _run_case(ks[1], seq_len=13, batch=4, d_model=128, max_seq_len=32,
              target_block_bytes=4 * 1024)
    # Broadened flat path: D=32, B=4 -> B*D=128 (concat replication branch).
    _run_case(ks[2], seq_len=16, batch=4, d_model=32, max_seq_len=32,
              target_block_bytes=4 * 1024)
    # 3-D fallback path: B*D = 64 not a multiple of 128.
    _run_case(ks[3], seq_len=8, batch=2, d_model=32, max_seq_len=16,
              target_block_bytes=4 << 20)
    # bf16 activations: dtype-aware sublane (16), f32 add, cast on store.
    _run_case(ks[4], seq_len=40, batch=2, d_model=128, max_seq_len=64,
              target_block_bytes=8 * 1024, dtype=jnp.bfloat16)

    print("KERNEL_OK")
</pallas_src>

<mosaic_0001>
module attributes {stable_mosaic.version = 11 : i64} {
  func.func @_pos_enc_flat_kernel(%arg0: i32, %arg1: memref<8x256xf32, #tpu.memory_space<vmem>>, %arg2: memref<16x128xf32, #tpu.memory_space<vmem>>, %arg3: memref<8x256xf32, #tpu.memory_space<vmem>>) attributes {dimension_semantics = [#tpu.dimension_semantics<parallel>], iteration_bounds = array<i64: 2>, scalar_prefetch = 0 : i64, scratch_operands = 0 : i64, tpu.core_type = #tpu.core_type<tc>, window_params = [{transform_indices = @transform_0, window_bounds = array<i64: 8, 256>}, {pipeline_mode = #tpu.pipeline_mode<synchronous>, transform_indices = @transform_1, window_bounds = array<i64: 16, 128>}, {transform_indices = @transform_2, window_bounds = array<i64: 8, 256>}]} {
    %c8_i32 = arith.constant 8 : i32
    %0 = arith.muli %arg0, %c8_i32 : i32
    %1 = tpu.assume_multiple %0, 8 : i32
    %2 = arith.index_cast %1 : i32 to index
    %c0 = arith.constant 0 : index
    %3 = vector.load %arg2[%2, %c0] : memref<16x128xf32, #tpu.memory_space<vmem>>, vector<8x128xf32>
    %c0_0 = arith.constant 0 : index
    %c0_1 = arith.constant 0 : index
    %4 = vector.load %arg1[%c0_0, %c0_1] : memref<8x256xf32, #tpu.memory_space<vmem>>, vector<8x128xf32>
    %5 = arith.addf %4, %3 : vector<8x128xf32>
    %c0_2 = arith.constant 0 : index
    %c0_3 = arith.constant 0 : index
    %6 = vector.load %arg3[%c0_2, %c0_3] : memref<8x256xf32, #tpu.memory_space<vmem>>, vector<8x128xf32>
    tpu.vector_store %arg3[%c0_2, %c0_3], %5 {strides = array<i32>} : memref<8x256xf32, #tpu.memory_space<vmem>>, vector<8x128xf32>,
    %c0_4 = arith.constant 0 : index
    %c128 = arith.constant 128 : index
    %7 = vector.load %arg1[%c0_4, %c128] : memref<8x256xf32, #tpu.memory_space<vmem>>, vector<8x128xf32>
    %8 = arith.addf %7, %3 : vector<8x128xf32>
    %c0_5 = arith.constant 0 : index
    %c128_6 = arith.constant 128 : index
    %9 = vector.load %arg3[%c0_5, %c128_6] : memref<8x256xf32, #tpu.memory_space<vmem>>, vector<8x128xf32>
    tpu.vector_store %arg3[%c0_5, %c128_6], %8 {strides = array<i32>} : memref<8x256xf32, #tpu.memory_space<vmem>>, vector<8x128xf32>,
    return
  }
  func.func @transform_0(%arg0: i32) -> (i32, i32) {
    %c0_i32 = arith.constant 0 : i32
    %c0_i32_0 = arith.constant 0 : i32
    return %arg0, %c0_i32 : i32, i32
  }
  func.func @transform_1(%arg0: i32) -> (i32, i32) {
    %c0_i32 = arith.constant 0 : i32
    %c0_i32_0 = arith.constant 0 : i32
    %c0_i32_1 = arith.constant 0 : i32
    return %c0_i32, %c0_i32_0 : i32, i32
  }
  func.func @transform_2(%arg0: i32) -> (i32, i32) {
    %c0_i32 = arith.constant 0 : i32
    %c0_i32_0 = arith.constant 0 : i32
    return %arg0, %c0_i32 : i32, i32
  }
}

</mosaic_0001>

<llo_original>
// kernel: position_encoder_forward.1
$region0: #{position_encoder_forward.1}
  #allocation0 [shape = 'u32[]', space=smem, size = 0x4, offset = 0x4, fixed_abs, tag = 'smem constant byte address 0x4 - core index']
  #allocation1 [shape = 'u32[144,128]{1,0:T(1,128)}', space=vmem, size = 0x12000, scoped, tag = 'internal scratch']
  %s0 = inlined_call_operand.vmem [shape: f32[16,256], index: 0, kind: input, shape index: {}, may-alias: {0,2}]
  %s1 = inlined_call_operand.vmem [shape: f32[16,128], index: 1, kind: input, shape index: {}]
  %s2 = inlined_call_operand.vmem [shape: f32[16,256], index: 2, kind: output, shape index: {}, may-alias: {0,2}]
  %s3 = sld [smem:[#allocation0]]
  $region41: #{position_encoder_forward.1} parent=0
    _
  %s5 = ssub.s32 1, %s3
  %s6 = scalar_select 0, %s5, %s3
  loop: start=0, step=1, limit=4
  $region2: #{position_encoder_forward.1} parent=0 // loop_pre_header
    _
  $region3: #{position_encoder_forward.1} parent=0 // loop_header
    %s8 = sphi 0, %s12
    %p9 = scmp.ge.s32.totalorder %s8, 4
    %s18 = sphi 0, %s20
    %s21 = sphi 0, %s18
    %s22 = sphi 0, %s21
    %s38 = sphi 0, %s22
    %s42 = sphi 0, %s42
    %s44 = sphi 0, %s42
    %s45 = sphi 0, %s44
    %s59 = sphi 0, %s45
    %s65 = sphi 0, %s67
    %s68 = sphi 0, %s65
    %s69 = sphi 0, %s68
    %s85 = sphi 0, %s69
  $region4: #{position_encoder_forward.1} parent=0 // loop_header_branch
    %11 = sbr.rel (%p9) target = $region8
  $region5: #{position_encoder_forward.1} parent=0 // loop_body
    %s13 = ssub.s32 %s8, 1
    %s14 = ssub.s32 %s8, 2
    %s15 = sadd.s32 %s8, 1
    %s16 = ssub.s32 %s8, %s15
    %p17 = scmp.eq.s32.totalorder %s16, 0
    %s19 = sadd.s32 %s18, 1
    %s20 = scalar_select %p17, %s18, %s19
    %p23 = pneg %p17
    %p24 = scmp.eq.s32.totalorder %s8, 1
    %p25 = por %p23, %p24
    %p26 = scmp.ne.s32.totalorder %s18, %s21
    %p27 = scmp.eq.s32.totalorder %s8, 0
    %p28 = por %p26, %p27
    %p29 = scmp.ne.s32.totalorder %s18, %s21
    %p30 = scmp.eq.s32.totalorder %s13, 1
    %p31 = por %p29, %p30
    %p32 = scmp.ne.s32.totalorder %s21, %s22
    %p33 = scmp.eq.s32.totalorder %s13, 0
    %p34 = por %p32, %p33
    %p35 = scmp.ne.s32.totalorder %s21, %s22
    %p36 = scmp.eq.s32.totalorder %s14, 1
    %p37 = por %p35, %p36
    %p39 = scmp.ne.s32.totalorder %s22, %s38
    %p40 = scmp.eq.s32.totalorder %s14, 0
    %p41 = por %p39, %p40
    %s43 = sadd.s32 %s42, 1
    %p46 = scmp.eq.s32.totalorder %s8, 1
    %p47 = scmp.ne.s32.totalorder %s42, %s44
    %p48 = scmp.eq.s32.totalorder %s8, 0
    %p49 = por %p47, %p48
    %p50 = scmp.ne.s32.totalorder %s42, %s44
    %p51 = scmp.eq.s32.totalorder %s13, 1
    %p52 = por %p50, %p51
    %p53 = scmp.ne.s32.totalorder %s44, %s45
    %p54 = scmp.eq.s32.totalorder %s13, 0
    %p55 = por %p53, %p54
    %p56 = scmp.ne.s32.totalorder %s44, %s45
    %p57 = scmp.eq.s32.totalorder %s14, 1
    %p58 = por %p56, %p57
    %p60 = scmp.ne.s32.totalorder %s45, %s59
    %p61 = scmp.eq.s32.totalorder %s14, 0
    %p62 = por %p60, %p61
    %s63 = ssub.s32 %s8, %s15
    %p64 = scmp.eq.s32.totalorder %s63, 0
    %s66 = sadd.s32 %s65, 1
    %s67 = scalar_select %p64, %s65, %s66
    %p70 = pneg %p64
    %p71 = scmp.eq.s32.totalorder %s8, 1
    %p72 = por %p70, %p71
    %p73 = scmp.ne.s32.totalorder %s65, %s68
    %p74 = scmp.eq.s32.totalorder %s8, 0
    %p75 = por %p73, %p74
    %p76 = scmp.ne.s32.totalorder %s65, %s68
    %p77 = scmp.eq.s32.totalorder %s13, 1
    %p78 = por %p76, %p77
    %p79 = scmp.ne.s32.totalorder %s68, %s69
    %p80 = scmp.eq.s32.totalorder %s13, 0
    %p81 = por %p79, %p80
    %p82 = scmp.ne.s32.totalorder %s68, %s69
    %p83 = scmp.eq.s32.totalorder %s14, 1
    %p84 = por %p82, %p83
    %p86 = scmp.ne.s32.totalorder %s69, %s85
    %p87 = scmp.eq.s32.totalorder %s14, 0
    %p88 = por %p86, %p87
    %p89 = scmp.le.s32.totalorder 1, %s8
    %p90 = scmp.lt.s32.totalorder %s8, 3
    %p91 = pnand %p89, %p90
    %p92 = pneg %p91
    // Predicated region
    $region9: #{position_encoder_forward.1} parent=5 // pred_check
      _
    $region10: #{position_encoder_forward.1} parent=5 // pred_check_branch
      %94 = sbr.rel (%p91) target = $region12
    $region11: #{position_encoder_forward.1} parent=5 // pred_region
      %s95 = ssub.s32 %s8, 1
      // Predicated region
      $region13: #{position_encoder_forward.1} parent=11 // pred_check
        %p96 = pneg %p55
      $region14: #{position_encoder_forward.1} parent=11 // pred_check_branch
        %98 = sbr.rel (%p96) target = $region16
      $region15: #{position_encoder_forward.1} parent=11 // pred_region
        _
      $region16: #{position_encoder_forward.1} parent=11 // pred_fallthru
        _
    $region12: #{position_encoder_forward.1} parent=5 // pred_fallthru
      _
    %p99 = scmp.lt.s32.totalorder %s8, 2
    // Predicated region
    $region17: #{position_encoder_forward.1} parent=5 // pred_check
      %p100 = pneg %p99
    $region18: #{position_encoder_forward.1} parent=5 // pred_check_branch
      %102 = sbr.rel (%p100) target = $region20
    $region19: #{position_encoder_forward.1} parent=5 // pred_region
      // Predicated region
      $region21: #{position_encoder_forward.1} parent=19 // pred_check
        %p103 = pneg %p28
      $region22: #{position_encoder_forward.1} parent=19 // pred_check_branch
        %105 = sbr.rel (%p103) target = $region24
      $region23: #{position_encoder_forward.1} parent=19 // pred_region
        %p106 = scmp.lt.s32.totalorder %s8, 1
        %s107 = scalar_select %p106, %s8, 1
        %s108 = smul.addr %s107, 2
        %s109 = smul.addr %s108, 8
        %s110 = scalar_lea.vmem %s0, %s109
      $region24: #{position_encoder_forward.1} parent=19 // pred_fallthru
        _
    $region20: #{position_encoder_forward.1} parent=5 // pred_fallthru
      _
    %p111 = scmp.le.s32.totalorder 1, %s8
    %p112 = scmp.lt.s32.totalorder %s8, 3
    %p113 = pnand %p111, %p112
    %p114 = pneg %p113
    // Predicated region
    $region25: #{position_encoder_forward.1} parent=5 // pred_check
      _
    $region26: #{position_encoder_forward.1} parent=5 // pred_check_branch
      %116 = sbr.rel (%p113) target = $region28
    $region27: #{position_encoder_forward.1} parent=5 // pred_region
      %s117 = ssub.s32 %s8, 1
      %p118 = scmp.lt.s32.totalorder %s13, 1
      %s119 = scalar_select %p118, %s13, 1
      %s120 = smul.addr %s119, 2
      %s121 = smul.addr %s120, 8
      %s122 = scalar_lea.vmem %s0, %s121
      %p123 = pneg %p34
      %p124 = pneg %p31
      %p125 = pneg %p55
      %p126 = pneg %p52
      %p127 = pneg %p81
      %p128 = pneg %p78
      %p129 = scmp.lt.s32.totalorder %s13, 1
      %s130 = scalar_select %p129, %s13, 1
      %s131 = smul.addr %s130, 2
      %s132 = smul.addr %s131, 8
      %s133 = scalar_lea.vmem %s2, %s132
      %p134 = scmp.lt.s32.totalorder %s13, 1
      %s135 = scalar_select %p134, %s13, 1
      %s136 = smul.addr %s135, 2
      %s137 = smul.addr %s136, 8
      %s138 = scalar_lea.vmem %s0, %s137
      %p139 = scmp.lt.s32.totalorder %s13, 1
      %s140 = scalar_select %p139, %s13, 1
      %s141 = smul.addr %s140, 2
      %s142 = smul.addr %s141, 8
      %s143 = scalar_lea.vmem %s2, %s142
      %s144 = smul.u32 %s13, 8
      %s145 = scalar_lea.vmem %s1, %s144
      %v146 = vld [vmem:[%s145] sm:$0xff]
      %v147 = vld [vmem:[%s138] sm:$0xff]
      %v148 = vadd.f32 %v147, %v146
      %149 = vst [vmem:[%s143] sm:$0xff] %v148
      %v150 = vld [vmem:[%s138 + $0x8] sm:$0xff]
      %v151 = vadd.f32 %v150, %v146
      %152 = vst [vmem:[%s143 + $0x8] sm:$0xff] %v151
      %p153 = scmp.lt.s32.totalorder %s13, 1
      %s154 = scalar_select %p153, %s13, 1
      %s155 = smul.addr %s154, 2
      %s156 = smul.addr %s155, 8
      %s157 = scalar_lea.vmem %s2, %s156
      // Predicated region
      $region29: #{position_encoder_forward.1} parent=27 // pred_check
        %p158 = pneg %p78
      $region30: #{position_encoder_forward.1} parent=27 // pred_check_branch
        %160 = sbr.rel (%p158) target = $region32
      $region31: #{position_encoder_forward.1} parent=27 // pred_region
        _
      $region32: #{position_encoder_forward.1} parent=27 // pred_fallthru
        _
    $region28: #{position_encoder_forward.1} parent=5 // pred_fallthru
      _
    %p161 = scmp.le.s32.totalorder 2, %s8
    // Predicated region
    $region33: #{position_encoder_forward.1} parent=5 // pred_check
      %p162 = pneg %p161
    $region34: #{position_encoder_forward.1} parent=5 // pred_check_branch
      %164 = sbr.rel (%p162) target = $region36
    $region35: #{position_encoder_forward.1} parent=5 // pred_region
      %s165 = ssub.s32 %s8, 2
      // Predicated region
      $region37: #{position_encoder_forward.1} parent=35 // pred_check
        %p166 = pneg %p84
      $region38: #{position_encoder_forward.1} parent=35 // pred_check_branch
        %168 = sbr.rel (%p166) target = $region40
      $region39: #{position_encoder_forward.1} parent=35 // pred_region
        %p169 = scmp.lt.s32.totalorder %s14, 1
        %s170 = scalar_select %p169, %s14, 1
        %s171 = smul.addr %s170, 2
        %s172 = smul.addr %s171, 8
        %s173 = scalar_lea.vmem %s2, %s172
      $region40: #{position_encoder_forward.1} parent=35 // pred_fallthru
        _
    $region36: #{position_encoder_forward.1} parent=5 // pred_fallthru
      _
  $region6: #{position_encoder_forward.1} parent=0 // loop_footer
    %s12 = sadd.s32 1, %s8
  $region7: #{position_encoder_forward.1} parent=0 // loop_footer_branch
    %7 = sbr.rel target = $region3
  $region8: #{position_encoder_forward.1} parent=0 // loop_exit
    _

</llo_original>
